<compile_context>
chip_gen: v5e
topology: v5e:2x2
jax: 0.10.0
libtpu: 0.0.40
codegen_flags: <defaults>
</compile_context>

<pallas_src>
import functools

import jax
import jax.numpy as jnp
from jax import lax
from jax.experimental import pallas as pl
from jax.experimental.pallas import tpu as pltpu


def _attention_kernel(compute_dtype, has_lengths, q_ref, ctx_ref, win_t_ref,
                      wout_t_ref, *rest):
    if has_lengths:
        bias_ref, out_ref, attw_ref = rest
    else:
        out_ref, attw_ref = rest
        bias_ref = None

    q = q_ref[...]                                           # (BB, O, D) f32
    ctx = ctx_ref[...]                                       # (BB, C, D) f32
    BB, O, D = q.shape

    # MXU operands (bf16 by default); accumulation is always f32.
    q_c = q.astype(compute_dtype)
    ctx_c = ctx.astype(compute_dtype)
    w_in_c = win_t_ref[...].astype(compute_dtype)            # (D, D) pre-transposed

    # linear_in over all BB*O rows in a single matmul (no in-kernel .T).
    qg = lax.dot_general(
        q_c.reshape(BB * O, D), w_in_c,
        dimension_numbers=(((1,), (0,)), ((), ())),
        preferred_element_type=jnp.float32)                  # (BB*O, D) f32
    qg3 = qg.reshape(BB, O, D)

    # attention_scores = bmm(qg, context^T): contract D of both operands
    # directly (MXU transposed-RHS path, no XLU transpose of context).
    scores = lax.dot_general(
        qg3.astype(compute_dtype), ctx_c,
        dimension_numbers=(((2,), (2,)), ((0,), (0,))),
        preferred_element_type=jnp.float32)                  # (BB, O, C) f32

    if bias_ref is not None:
        # context_lengths masking: additive bias (0 valid / -1e30 masked),
        # computed in the wrapper, broadcast over the O axis.
        scores = scores + bias_ref[...]                      # (BB, 1, C)

    # softmax over the context axis — f32 elementwise (VPU/EUP).
    m = jnp.max(scores, axis=-1, keepdims=True)
    e = jnp.exp(scores - m)
    denom = jnp.sum(e, axis=-1, keepdims=True)
    w = e * pl.reciprocal(denom, approx=True)                # (BB, O, C) f32

    # mix = bmm(attention_weights, context)
    mix = lax.dot_general(
        w.astype(compute_dtype), ctx_c,
        dimension_numbers=(((2,), (1,)), ((0,), (0,))),
        preferred_element_type=jnp.float32)                  # (BB, O, D) f32

    # output = tanh(concat([mix, qg], -1) @ W_out^T)
    #        = tanh(mix @ W_out_T[:D] + qg @ W_out_T[D:])
    w_mix_c = wout_t_ref[0:D, :].astype(compute_dtype)       # (D, D)
    w_q_c = wout_t_ref[D:2 * D, :].astype(compute_dtype)     # (D, D)
    out = lax.dot_general(
        mix.reshape(BB * O, D).astype(compute_dtype), w_mix_c,
        dimension_numbers=(((1,), (0,)), ((), ())),
        preferred_element_type=jnp.float32)
    out = out + lax.dot_general(
        qg.astype(compute_dtype), w_q_c,
        dimension_numbers=(((1,), (0,)), ((), ())),
        preferred_element_type=jnp.float32)
    out = jnp.tanh(out)                                      # (BB*O, D) f32

    out_ref[...] = out.reshape(BB, O, D).astype(out_ref.dtype)
    attw_ref[...] = w.astype(attw_ref.dtype)


def attention_pallas(query, context, w_in, w_out, context_lengths=None,
                     compute_dtype=jnp.bfloat16):
    B, O, D = query.shape
    C = context.shape[1]
    assert w_in.shape == (D, D)
    assert w_out.shape == (D, 2 * D)

    # Pre-transpose the (static) Linear weights in the wrapper so the kernel
    # only issues plain row-major matmuls.
    w_in_t = w_in.T                # (D, D):  x @ w_in_t       == linear_in(x)
    w_out_t = w_out.T              # (2D, D): [mix, qg] @ w_out_t == linear_out(.)

    # Fold the batch into as few grid steps as possible.  Keep a 2-way
    # "parallel" grid axis when the batch allows it so v7x can shard the work
    # across its two TensorCores; on v5e/v6e (1 TC) the steps simply pipeline.
    num_blocks = 2 if (B >= 2 and B % 2 == 0) else 1
    BB = B // num_blocks

    has_lengths = context_lengths is not None
    inputs = [query, context, w_in_t, w_out_t]
    in_specs = [
        pl.BlockSpec((BB, O, D), lambda b: (b, 0, 0)),
        pl.BlockSpec((BB, C, D), lambda b: (b, 0, 0)),
        pl.BlockSpec((D, D), lambda b: (0, 0)),
        pl.BlockSpec((2 * D, D), lambda b: (0, 0)),
    ]
    if has_lengths:
        # masked_fill(-inf) before softmax, expressed as an additive bias.
        col = jnp.arange(C, dtype=jnp.int32)[None, :]
        valid = col < context_lengths.astype(jnp.int32)[:, None]        # (B, C)
        bias = jnp.where(valid, 0.0, -1e30).astype(jnp.float32)
        inputs.append(bias.reshape(B, 1, C))
        in_specs.append(pl.BlockSpec((BB, 1, C), lambda b: (b, 0, 0)))

    out_shape = (jax.ShapeDtypeStruct((B, O, D), query.dtype),
                 jax.ShapeDtypeStruct((B, O, C), jnp.float32))
    out_specs = (pl.BlockSpec((BB, O, D), lambda b: (b, 0, 0)),
                 pl.BlockSpec((BB, O, C), lambda b: (b, 0, 0)))

    kernel = functools.partial(_attention_kernel, compute_dtype, has_lengths)
    return pl.pallas_call(
        kernel,
        grid=(num_blocks,),
        in_specs=in_specs,
        out_specs=out_specs,
        out_shape=out_shape,
        compiler_params=pltpu.CompilerParams(
            dimension_semantics=("parallel",)),
    )(*inputs)


def attention_reference(query, context, w_in, w_out, context_lengths=None):
    """Pure-JAX f32 reference mirroring the PyTorch module."""
    C = context.shape[1]
    qg = jnp.einsum('bod,ed->boe', query, w_in)
    scores = jnp.einsum('bod,bcd->boc', qg, context)
    if context_lengths is not None:
        mask = jnp.arange(C)[None, :] >= context_lengths[:, None]        # (B, C)
        scores = jnp.where(mask[:, None, :], -jnp.inf, scores)
    w = jax.nn.softmax(scores, axis=-1)
    mix = jnp.einsum('boc,bcd->bod', w, context)
    combined = jnp.concatenate([mix, qg], axis=-1)
    out = jnp.tanh(jnp.einsum('bok,dk->bod', combined, w_out))
    return out, w


if __name__ == "__main__":
    B, O, C, D = 2, 8, 16, 32   # batch, output_len, context_len, dimensions

    key = jax.random.PRNGKey(0)
    kq, kc, kw1, kw2 = jax.random.split(key, 4)
    query = jax.random.normal(kq, (B, O, D), jnp.float32)
    context = jax.random.normal(kc, (B, C, D), jnp.float32)
    # Deterministic synthetic weights (nn.Linear weight shapes: (out, in)).
    w_in = jax.random.normal(kw1, (D, D), jnp.float32) / jnp.sqrt(D)
    w_out = jax.random.normal(kw2, (D, 2 * D), jnp.float32) / jnp.sqrt(2 * D)

    out_ref, attw_ref = attention_reference(query, context, w_in, w_out)

    # Default path: bf16 MXU operands, f32 accumulation / softmax / tanh.
    # Tolerance loosened for bf16 matmul operands (outputs are O(1)-bounded).
    out, attw = attention_pallas(query, context, w_in, w_out)
    jax.block_until_ready((out, attw))
    assert jnp.allclose(out, out_ref, atol=1e-1, rtol=1e-1), "bf16 output mismatch"
    assert jnp.allclose(attw, attw_ref, atol=1e-1, rtol=1e-1), "bf16 weights mismatch"

    # Matmul-exact path (f32 operands); tolerance covers only the EUP
    # approximate reciprocal used for the softmax normalization.
    out32, attw32 = attention_pallas(query, context, w_in, w_out,
                                     compute_dtype=jnp.float32)
    jax.block_until_ready((out32, attw32))
    assert jnp.allclose(out32, out_ref, atol=2e-2, rtol=2e-2), "f32 output mismatch"
    assert jnp.allclose(attw32, attw_ref, atol=2e-2, rtol=2e-2), "f32 weights mismatch"

    # context_lengths masking path.
    lens = jnp.array([C, 9], dtype=jnp.int32)
    outm, attwm = attention_pallas(query, context, w_in, w_out,
                                   context_lengths=lens,
                                   compute_dtype=jnp.float32)
    jax.block_until_ready((outm, attwm))
    outm_ref, attwm_ref = attention_reference(query, context, w_in, w_out, lens)
    assert jnp.allclose(outm, outm_ref, atol=2e-2, rtol=2e-2), "masked output mismatch"
    assert jnp.allclose(attwm, attwm_ref, atol=2e-2, rtol=2e-2), "masked weights mismatch"
    assert jnp.all(attwm[1, :, 9:] < 1e-6), "masked positions should get ~0 weight"

    print("KERNEL_OK")
</pallas_src>

<mosaic_0001>
module attributes {stable_mosaic.version = 11 : i64} {
  func.func @_attention_kernel(%arg0: i32, %arg1: memref<1x8x32xf32, #tpu.memory_space<vmem>>, %arg2: memref<1x16x32xf32, #tpu.memory_space<vmem>>, %arg3: memref<32x32xf32, #tpu.memory_space<vmem>>, %arg4: memref<64x32xf32, #tpu.memory_space<vmem>>, %arg5: memref<1x8x32xf32, #tpu.memory_space<vmem>>, %arg6: memref<1x8x16xf32, #tpu.memory_space<vmem>>) attributes {dimension_semantics = [#tpu.dimension_semantics<parallel>], iteration_bounds = array<i64: 2>, scalar_prefetch = 0 : i64, scratch_operands = 0 : i64, tpu.core_type = #tpu.core_type<tc>, window_params = [{transform_indices = @transform_0, window_bounds = array<i64: 1, 8, 32>}, {transform_indices = @transform_1, window_bounds = array<i64: 1, 16, 32>}, {pipeline_mode = #tpu.pipeline_mode<synchronous>, transform_indices = @transform_2, window_bounds = array<i64: 32, 32>}, {pipeline_mode = #tpu.pipeline_mode<synchronous>, transform_indices = @transform_3, window_bounds = array<i64: 64, 32>}, {transform_indices = @transform_4, window_bounds = array<i64: 1, 8, 32>}, {transform_indices = @transform_5, window_bounds = array<i64: 1, 8, 16>}]} {
    %c0 = arith.constant 0 : index
    %c0_0 = arith.constant 0 : index
    %c0_1 = arith.constant 0 : index
    %0 = vector.load %arg1[%c0, %c0_0, %c0_1] : memref<1x8x32xf32, #tpu.memory_space<vmem>>, vector<1x8x32xf32>
    %c0_2 = arith.constant 0 : index
    %c0_3 = arith.constant 0 : index
    %c0_4 = arith.constant 0 : index
    %1 = vector.load %arg2[%c0_2, %c0_3, %c0_4] : memref<1x16x32xf32, #tpu.memory_space<vmem>>, vector<1x16x32xf32>
    %2 = arith.truncf %0 : vector<1x8x32xf32> to vector<1x8x32xbf16>
    %3 = arith.truncf %1 : vector<1x16x32xf32> to vector<1x16x32xbf16>
    %c0_5 = arith.constant 0 : index
    %c0_6 = arith.constant 0 : index
    %4 = vector.load %arg3[%c0_5, %c0_6] : memref<32x32xf32, #tpu.memory_space<vmem>>, vector<32x32xf32>
    %5 = arith.truncf %4 : vector<32x32xf32> to vector<32x32xbf16>
    %6 = vector.shape_cast %2 : vector<1x8x32xbf16> to vector<8x32xbf16>
    %cst = arith.constant dense<0.000000e+00> : vector<8x32xf32>
    %7 = tpu.matmul %6, %5, %cst {dimension_numbers = #tpu.dot_dimension_numbers<[1], [0], [0], [1], [0, 0, 1, 1], [], []>} : vector<8x32xbf16>, vector<32x32xbf16>, vector<8x32xf32> -> vector<8x32xf32>
    %8 = vector.shape_cast %7 : vector<8x32xf32> to vector<1x8x32xf32>
    %9 = arith.truncf %8 : vector<1x8x32xf32> to vector<1x8x32xbf16>
    %cst_7 = arith.constant dense<0.000000e+00> : vector<1x8x16xf32>
    %10 = tpu.matmul %9, %3, %cst_7 {dimension_numbers = #tpu.dot_dimension_numbers<[2], [2], [1], [1], [0, 0, 0, 1, 1, 1], [0], [0]>} : vector<1x8x32xbf16>, vector<1x16x32xbf16>, vector<1x8x16xf32> -> vector<1x8x16xf32>
    %cst_8 = arith.constant dense<0xFF800000> : vector<1x8xf32>
    %11 = vector.multi_reduction <maximumf>, %10, %cst_8 [2] : vector<1x8x16xf32> to vector<1x8xf32>
    %12 = vector.shape_cast %11 : vector<1x8xf32> to vector<1x8x1xf32>
    %13 = vector.broadcast %12 : vector<1x8x1xf32> to vector<1x8x16xf32>
    %14 = arith.subf %10, %13 : vector<1x8x16xf32>
    %15 = math.exp %14 : vector<1x8x16xf32>
    %cst_9 = arith.constant dense<0.000000e+00> : vector<1x8xf32>
    %16 = vector.multi_reduction <add>, %15, %cst_9 [2] : vector<1x8x16xf32> to vector<1x8xf32>
    %17 = vector.shape_cast %16 : vector<1x8xf32> to vector<1x8x1xf32>
    %18 = tpu.reciprocal %17 {approx = true} : vector<1x8x1xf32> -> vector<1x8x1xf32>
    %19 = vector.broadcast %18 : vector<1x8x1xf32> to vector<1x8x16xf32>
    %20 = arith.mulf %15, %19 : vector<1x8x16xf32>
    %21 = arith.truncf %20 : vector<1x8x16xf32> to vector<1x8x16xbf16>
    %cst_10 = arith.constant dense<0.000000e+00> : vector<1x8x32xf32>
    %22 = tpu.matmul %21, %3, %cst_10 {dimension_numbers = #tpu.dot_dimension_numbers<[2], [1], [1], [2], [0, 0, 0, 1, 1, 2], [0], [0]>} : vector<1x8x16xbf16>, vector<1x16x32xbf16>, vector<1x8x32xf32> -> vector<1x8x32xf32>
    %c0_11 = arith.constant 0 : index
    %c0_12 = arith.constant 0 : index
    %23 = vector.load %arg4[%c0_11, %c0_12] : memref<64x32xf32, #tpu.memory_space<vmem>>, vector<32x32xf32>
    %24 = arith.truncf %23 : vector<32x32xf32> to vector<32x32xbf16>
    %c32 = arith.constant 32 : index
    %c0_13 = arith.constant 0 : index
    %25 = vector.load %arg4[%c32, %c0_13] : memref<64x32xf32, #tpu.memory_space<vmem>>, vector<32x32xf32>
    %26 = arith.truncf %25 : vector<32x32xf32> to vector<32x32xbf16>
    %27 = vector.shape_cast %22 : vector<1x8x32xf32> to vector<8x32xf32>
    %28 = arith.truncf %27 : vector<8x32xf32> to vector<8x32xbf16>
    %cst_14 = arith.constant dense<0.000000e+00> : vector<8x32xf32>
    %29 = tpu.matmul %28, %24, %cst_14 {dimension_numbers = #tpu.dot_dimension_numbers<[1], [0], [0], [1], [0, 0, 1, 1], [], []>} : vector<8x32xbf16>, vector<32x32xbf16>, vector<8x32xf32> -> vector<8x32xf32>
    %30 = arith.truncf %7 : vector<8x32xf32> to vector<8x32xbf16>
    %cst_15 = arith.constant dense<0.000000e+00> : vector<8x32xf32>
    %31 = tpu.matmul %30, %26, %cst_15 {dimension_numbers = #tpu.dot_dimension_numbers<[1], [0], [0], [1], [0, 0, 1, 1], [], []>} : vector<8x32xbf16>, vector<32x32xbf16>, vector<8x32xf32> -> vector<8x32xf32>
    %32 = arith.addf %29, %31 : vector<8x32xf32>
    %33 = math.tanh %32 : vector<8x32xf32>
    %34 = vector.shape_cast %33 : vector<8x32xf32> to vector<1x8x32xf32>
    %c0_16 = arith.constant 0 : index
    %c0_17 = arith.constant 0 : index
    %c0_18 = arith.constant 0 : index
    %35 = vector.load %arg5[%c0_16, %c0_17, %c0_18] : memref<1x8x32xf32, #tpu.memory_space<vmem>>, vector<1x8x32xf32>
    tpu.vector_store %arg5[%c0_16, %c0_17, %c0_18], %34 {strides = array<i32>} : memref<1x8x32xf32, #tpu.memory_space<vmem>>, vector<1x8x32xf32>,
    %c0_19 = arith.constant 0 : index
    %c0_20 = arith.constant 0 : index
    %c0_21 = arith.constant 0 : index
    %36 = vector.load %arg6[%c0_19, %c0_20, %c0_21] : memref<1x8x16xf32, #tpu.memory_space<vmem>>, vector<1x8x16xf32>
    tpu.vector_store %arg6[%c0_19, %c0_20, %c0_21], %20 {strides = array<i32>} : memref<1x8x16xf32, #tpu.memory_space<vmem>>, vector<1x8x16xf32>,
    return
  }
  func.func @transform_0(%arg0: i32) -> (i32, i32, i32) {
    %c0_i32 = arith.constant 0 : i32
    %c0_i32_0 = arith.constant 0 : i32
    %c0_i32_1 = arith.constant 0 : i32
    return %arg0, %c0_i32, %c0_i32_0 : i32, i32, i32
  }
  func.func @transform_1(%arg0: i32) -> (i32, i32, i32) {
    %c0_i32 = arith.constant 0 : i32
    %c0_i32_0 = arith.constant 0 : i32
    %c0_i32_1 = arith.constant 0 : i32
    return %arg0, %c0_i32, %c0_i32_0 : i32, i32, i32
  }
  func.func @transform_2(%arg0: i32) -> (i32, i32) {
    %c0_i32 = arith.constant 0 : i32
    %c0_i32_0 = arith.constant 0 : i32
    %c0_i32_1 = arith.constant 0 : i32
    return %c0_i32, %c0_i32_0 : i32, i32
  }
  func.func @transform_3(%arg0: i32) -> (i32, i32) {
    %c0_i32 = arith.constant 0 : i32
    %c0_i32_0 = arith.constant 0 : i32
    %c0_i32_1 = arith.constant 0 : i32
    return %c0_i32, %c0_i32_0 : i32, i32
  }
  func.func @transform_4(%arg0: i32) -> (i32, i32, i32) {
    %c0_i32 = arith.constant 0 : i32
    %c0_i32_0 = arith.constant 0 : i32
    %c0_i32_1 = arith.constant 0 : i32
    return %arg0, %c0_i32, %c0_i32_0 : i32, i32, i32
  }
  func.func @transform_5(%arg0: i32) -> (i32, i32, i32) {
    %c0_i32 = arith.constant 0 : i32
    %c0_i32_0 = arith.constant 0 : i32
    %c0_i32_1 = arith.constant 0 : i32
    return %arg0, %c0_i32, %c0_i32_0 : i32, i32, i32
  }
}

</mosaic_0001>

<llo_original>
// kernel: tpu_custom_call.1
$region0: #{tpu_custom_call.1}
  #allocation0 [shape = 'u32[]', space=smem, size = 0x4, offset = 0x4, fixed_abs, tag = 'smem constant byte address 0x4 - core index']
  #allocation1 [shape = 'u32[72,128]{1,0:T(1,128)}', space=vmem, size = 0x9000, scoped, tag = 'internal scratch']
  %s0 = inlined_call_operand.vmem [shape: f32[2,8,32], index: 0, kind: input, shape index: {}]
  %s1 = inlined_call_operand.vmem [shape: f32[2,16,32], index: 1, kind: input, shape index: {}]
  %s2 = inlined_call_operand.vmem [shape: f32[32,32], index: 2, kind: input, shape index: {}]
  %s3 = inlined_call_operand.vmem [shape: f32[64,32], index: 3, kind: input, shape index: {}]
  %s4 = inlined_call_operand.hbm [shape: f32[2,8,32], index: 4, kind: output, shape index: {0}]
  %s5 = inlined_call_operand.hbm [shape: f32[2,8,16], index: 5, kind: output, shape index: {1}]
  %6 = xla_tuple %s4, %s5
  %s7 = sld [smem:[#allocation0]]
  $region57: #{tpu_custom_call.1} parent=0
    _
  %s9 = ssub.s32 1, %s7
  %s10 = scalar_select 0, %s9, %s7
  $region1: #{tpu_custom_call.1} parent=0
    #allocation2 [shape = 'u8[8192]{0}', space=vmem, size = 0x2000, scoped, tag = 'output window, operand 0']
    #allocation3 [shape = 's32[2]{0}', space=sflag, size = 0x8, scoped, tag = 'scoped memory for tpu_custom_call.1']
    #allocation4 [shape = 'u8[8192]{0}', space=vmem, size = 0x2000, scoped, tag = 'output window, operand 1']
    #allocation5 [shape = 's32[2]{0}', space=sflag, size = 0x8, scoped, tag = 'scoped memory for tpu_custom_call.1']
    %11 = vsyncpa [#allocation3], 0
    %s12 = scalar_lea.sflag [#allocation3], 1
    %13 = vsyncpa %s12, 0
    %14 = vsyncpa [#allocation5], 0
    %s15 = scalar_lea.sflag [#allocation5], 1
    %16 = vsyncpa %s15, 0
    loop: start=0, step=1, limit=4
    $region2: #{tpu_custom_call.1} parent=1 // loop_pre_header
      _
    $region3: #{tpu_custom_call.1} parent=1 // loop_header
      %s18 = sphi 0, %s22
      %p19 = scmp.ge.s32.totalorder %s18, 4
      %s28 = sphi 0, %s30
      %s31 = sphi 0, %s28
      %s32 = sphi 0, %s31
      %s48 = sphi 0, %s32
      %s54 = sphi 0, %s56
      %s57 = sphi 0, %s54
      %s58 = sphi 0, %s57
      %s74 = sphi 0, %s58
      %s78 = sphi 0, %s78
      %s80 = sphi 0, %s78
      %s81 = sphi 0, %s80
      %s95 = sphi 0, %s81
      %s99 = sphi 0, %s99
      %s101 = sphi 0, %s99
      %s102 = sphi 0, %s101
      %s116 = sphi 0, %s102
      %s122 = sphi 0, %s124
      %s125 = sphi 0, %s122
      %s126 = sphi 0, %s125
      %s142 = sphi 0, %s126
      %s148 = sphi 0, %s150
      %s151 = sphi 0, %s148
      %s152 = sphi 0, %s151
      %s168 = sphi 0, %s152
    $region4: #{tpu_custom_call.1} parent=1 // loop_header_branch
      %21 = sbr.rel (%p19) target = $region8
    $region5: #{tpu_custom_call.1} parent=1 // loop_body
      %s23 = ssub.s32 %s18, 1
      %s24 = ssub.s32 %s18, 2
      %s25 = sadd.s32 %s18, 1
      %s26 = ssub.s32 %s18, %s25
      %p27 = scmp.eq.s32.totalorder %s26, 0
      %s29 = sadd.s32 %s28, 1
      %s30 = scalar_select %p27, %s28, %s29
      %p33 = pneg %p27
      %p34 = scmp.eq.s32.totalorder %s18, 1
      %p35 = por %p33, %p34
      %p36 = scmp.ne.s32.totalorder %s28, %s31
      %p37 = scmp.eq.s32.totalorder %s18, 0
      %p38 = por %p36, %p37
      %p39 = scmp.ne.s32.totalorder %s28, %s31
      %p40 = scmp.eq.s32.totalorder %s23, 1
      %p41 = por %p39, %p40
      %p42 = scmp.ne.s32.totalorder %s31, %s32
      %p43 = scmp.eq.s32.totalorder %s23, 0
      %p44 = por %p42, %p43
      %p45 = scmp.ne.s32.totalorder %s31, %s32
      %p46 = scmp.eq.s32.totalorder %s24, 1
      %p47 = por %p45, %p46
      %p49 = scmp.ne.s32.totalorder %s32, %s48
      %p50 = scmp.eq.s32.totalorder %s24, 0
      %p51 = por %p49, %p50
      %s52 = ssub.s32 %s18, %s25
      %p53 = scmp.eq.s32.totalorder %s52, 0
      %s55 = sadd.s32 %s54, 1
      %s56 = scalar_select %p53, %s54, %s55
      %p59 = pneg %p53
      %p60 = scmp.eq.s32.totalorder %s18, 1
      %p61 = por %p59, %p60
      %p62 = scmp.ne.s32.totalorder %s54, %s57
      %p63 = scmp.eq.s32.totalorder %s18, 0
      %p64 = por %p62, %p63
      %p65 = scmp.ne.s32.totalorder %s54, %s57
      %p66 = scmp.eq.s32.totalorder %s23, 1
      %p67 = por %p65, %p66
      %p68 = scmp.ne.s32.totalorder %s57, %s58
      %p69 = scmp.eq.s32.totalorder %s23, 0
      %p70 = por %p68, %p69
      %p71 = scmp.ne.s32.totalorder %s57, %s58
      %p72 = scmp.eq.s32.totalorder %s24, 1
      %p73 = por %p71, %p72
      %p75 = scmp.ne.s32.totalorder %s58, %s74
      %p76 = scmp.eq.s32.totalorder %s24, 0
      %p77 = por %p75, %p76
      %s79 = sadd.s32 %s78, 1
      %p82 = scmp.eq.s32.totalorder %s18, 1
      %p83 = scmp.ne.s32.totalorder %s78, %s80
      %p84 = scmp.eq.s32.totalorder %s18, 0
      %p85 = por %p83, %p84
      %p86 = scmp.ne.s32.totalorder %s78, %s80
      %p87 = scmp.eq.s32.totalorder %s23, 1
      %p88 = por %p86, %p87
      %p89 = scmp.ne.s32.totalorder %s80, %s81
      %p90 = scmp.eq.s32.totalorder %s23, 0
      %p91 = por %p89, %p90
      %p92 = scmp.ne.s32.totalorder %s80, %s81
      %p93 = scmp.eq.s32.totalorder %s24, 1
      %p94 = por %p92, %p93
      %p96 = scmp.ne.s32.totalorder %s81, %s95
      %p97 = scmp.eq.s32.totalorder %s24, 0
      %p98 = por %p96, %p97
      %s100 = sadd.s32 %s99, 1
      %p103 = scmp.eq.s32.totalorder %s18, 1
      %p104 = scmp.ne.s32.totalorder %s99, %s101
      %p105 = scmp.eq.s32.totalorder %s18, 0
      %p106 = por %p104, %p105
      %p107 = scmp.ne.s32.totalorder %s99, %s101
      %p108 = scmp.eq.s32.totalorder %s23, 1
      %p109 = por %p107, %p108
      %p110 = scmp.ne.s32.totalorder %s101, %s102
      %p111 = scmp.eq.s32.totalorder %s23, 0
      %p112 = por %p110, %p111
      %p113 = scmp.ne.s32.totalorder %s101, %s102
      %p114 = scmp.eq.s32.totalorder %s24, 1
      %p115 = por %p113, %p114
      %p117 = scmp.ne.s32.totalorder %s102, %s116
      %p118 = scmp.eq.s32.totalorder %s24, 0
      %p119 = por %p117, %p118
      %s120 = ssub.s32 %s18, %s25
      %p121 = scmp.eq.s32.totalorder %s120, 0
      %s123 = sadd.s32 %s122, 1
      %s124 = scalar_select %p121, %s122, %s123
      %p127 = pneg %p121
      %p128 = scmp.eq.s32.totalorder %s18, 1
      %p129 = por %p127, %p128
      %p130 = scmp.ne.s32.totalorder %s122, %s125
      %p131 = scmp.eq.s32.totalorder %s18, 0
      %p132 = por %p130, %p131
      %p133 = scmp.ne.s32.totalorder %s122, %s125
      %p134 = scmp.eq.s32.totalorder %s23, 1
      %p135 = por %p133, %p134
      %p136 = scmp.ne.s32.totalorder %s125, %s126
      %p137 = scmp.eq.s32.totalorder %s23, 0
      %p138 = por %p136, %p137
      %p139 = scmp.ne.s32.totalorder %s125, %s126
      %p140 = scmp.eq.s32.totalorder %s24, 1
      %p141 = por %p139, %p140
      %p143 = scmp.ne.s32.totalorder %s126, %s142
      %p144 = scmp.eq.s32.totalorder %s24, 0
      %p145 = por %p143, %p144
      %s146 = ssub.s32 %s18, %s25
      %p147 = scmp.eq.s32.totalorder %s146, 0
      %s149 = sadd.s32 %s148, 1
      %s150 = scalar_select %p147, %s148, %s149
      %p153 = pneg %p147
      %p154 = scmp.eq.s32.totalorder %s18, 1
      %p155 = por %p153, %p154
      %p156 = scmp.ne.s32.totalorder %s148, %s151
      %p157 = scmp.eq.s32.totalorder %s18, 0
      %p158 = por %p156, %p157
      %p159 = scmp.ne.s32.totalorder %s148, %s151
      %p160 = scmp.eq.s32.totalorder %s23, 1
      %p161 = por %p159, %p160
      %p162 = scmp.ne.s32.totalorder %s151, %s152
      %p163 = scmp.eq.s32.totalorder %s23, 0
      %p164 = por %p162, %p163
      %p165 = scmp.ne.s32.totalorder %s151, %s152
      %p166 = scmp.eq.s32.totalorder %s24, 1
      %p167 = por %p165, %p166
      %p169 = scmp.ne.s32.totalorder %s152, %s168
      %p170 = scmp.eq.s32.totalorder %s24, 0
      %p171 = por %p169, %p170
      %p172 = scmp.le.s32.totalorder 1, %s18
      %p173 = scmp.lt.s32.totalorder %s18, 3
      %p174 = pnand %p172, %p173
      %p175 = pneg %p174
      // Predicated region
      $region9: #{tpu_custom_call.1} parent=5 // pred_check
        _
      $region10: #{tpu_custom_call.1} parent=5 // pred_check_branch
        %177 = sbr.rel (%p174) target = $region12
      $region11: #{tpu_custom_call.1} parent=5 // pred_region
        %s178 = ssub.s32 %s18, 1
        // Predicated region
        $region13: #{tpu_custom_call.1} parent=11 // pred_check
          %p179 = pneg %p91
        $region14: #{tpu_custom_call.1} parent=11 // pred_check_branch
          %181 = sbr.rel (%p179) target = $region16
        $region15: #{tpu_custom_call.1} parent=11 // pred_region
          _
        $region16: #{tpu_custom_call.1} parent=11 // pred_fallthru
          _
        // Predicated region
        $region17: #{tpu_custom_call.1} parent=11 // pred_check
          %p182 = pneg %p112
        $region18: #{tpu_custom_call.1} parent=11 // pred_check_branch
          %184 = sbr.rel (%p182) target = $region20
        $region19: #{tpu_custom_call.1} parent=11 // pred_region
          _
        $region20: #{tpu_custom_call.1} parent=11 // pred_fallthru
          _
      $region12: #{tpu_custom_call.1} parent=5 // pred_fallthru
        _
      %p185 = scmp.lt.s32.totalorder %s18, 2
      // Predicated region
      $region21: #{tpu_custom_call.1} parent=5 // pred_check
        %p186 = pneg %p185
      $region22: #{tpu_custom_call.1} parent=5 // pred_check_branch
        %188 = sbr.rel (%p186) target = $region24
      $region23: #{tpu_custom_call.1} parent=5 // pred_region
        // Predicated region
        $region25: #{tpu_custom_call.1} parent=23 // pred_check
          %p189 = pneg %p38
        $region26: #{tpu_custom_call.1} parent=23 // pred_check_branch
          %191 = sbr.rel (%p189) target = $region28
        $region27: #{tpu_custom_call.1} parent=23 // pred_region
          %p192 = scmp.lt.s32.totalorder %s18, 1
          %s193 = scalar_select %p192, %s18, 1
          %s194 = smul.addr %s193, 8
          %s195 = scalar_lea.vmem %s0, %s194
        $region28: #{tpu_custom_call.1} parent=23 // pred_fallthru
          _
        // Predicated region
        $region29: #{tpu_custom_call.1} parent=23 // pred_check
          %p196 = pneg %p64
        $region30: #{tpu_custom_call.1} parent=23 // pred_check_branch
          %198 = sbr.rel (%p196) target = $region32
        $region31: #{tpu_custom_call.1} parent=23 // pred_region
          %p199 = scmp.lt.s32.totalorder %s18, 1
          %s200 = scalar_select %p199, %s18, 1
          %s201 = smul.addr %s200, 2
          %s202 = smul.addr %s201, 8
          %s203 = scalar_lea.vmem %s1, %s202
        $region32: #{tpu_custom_call.1} parent=23 // pred_fallthru
          _
      $region24: #{tpu_custom_call.1} parent=5 // pred_fallthru
        _
      %p204 = scmp.le.s32.totalorder 1, %s18
      %p205 = scmp.lt.s32.totalorder %s18, 3
      %p206 = pnand %p204, %p205
      %p207 = pneg %p206
      // Predicated region
      $region33: #{tpu_custom_call.1} parent=5 // pred_check
        _
      $region34: #{tpu_custom_call.1} parent=5 // pred_check_branch
        %209 = sbr.rel (%p206) target = $region36
      $region35: #{tpu_custom_call.1} parent=5 // pred_region
        %s210 = ssub.s32 %s18, 1
        %p211 = scmp.lt.s32.totalorder %s23, 1
        %s212 = scalar_select %p211, %s23, 1
        %s213 = smul.addr %s212, 8
        %s214 = scalar_lea.vmem %s0, %s213
        %p215 = pneg %p44
        %p216 = pneg %p41
        %p217 = scmp.lt.s32.totalorder %s23, 1
        %s218 = scalar_select %p217, %s23, 1
        %s219 = smul.addr %s218, 2
        %s220 = smul.addr %s219, 8
        %s221 = scalar_lea.vmem %s1, %s220
        %p222 = pneg %p70
        %p223 = pneg %p67
        %p224 = pneg %p91
        %p225 = pneg %p88
        %p226 = pneg %p112
        %p227 = pneg %p109
        %p228 = pneg %p138
        %p229 = pneg %p135
        %s230 = sand.u32 %s125, 1
        %s231 = scalar_lea.sflag [#allocation3], %s230
        %s232 = sand.u32 %s125, 1
        %s233 = smul.addr %s232, 8
        %s234 = scalar_lea.vmem [#allocation2], %s233
        %p235 = pneg %p164
        %p236 = pneg %p161
        %s237 = sand.u32 %s151, 1
        %s238 = scalar_lea.sflag [#allocation5], %s237
        %s239 = sand.u32 %s151, 1
        %s240 = smul.addr %s239, 8
        %s241 = scalar_lea.vmem [#allocation4], %s240
        %p242 = scmp.lt.s32.totalorder %s23, 1
        %s243 = scalar_select %p242, %s23, 1
        %s244 = smul.addr %s243, 8
        %s245 = scalar_lea.vmem %s0, %s244
        %p246 = scmp.lt.s32.totalorder %s23, 1
        %s247 = scalar_select %p246, %s23, 1
        %s248 = smul.addr %s247, 2
        %s249 = smul.addr %s248, 8
        %s250 = scalar_lea.vmem %s1, %s249
        %v252 = vld [vmem:[%s245] sm:$0xff]
        %v253 = vld [vmem:[%s250] sm:$0xff]
        %v254 = vld [vmem:[%s250 + $0x8] sm:$0xff]
        %v255 = vpack.c.bf16 %v252, %v252
        %v256 = vpack.c.bf16 %v253, %v253
        %v257 = vpack.c.bf16 %v254, %v254
        %v258 = vld [vmem:[%s2] sm:$0xff]
        %v259 = vld [vmem:[%s2 + $0x8] sm:$0xff]
        %v260 = vld [vmem:[%s2 + $0x10] sm:$0xff]
        %v261 = vld [vmem:[%s2 + $0x18] sm:$0xff]
        %v262 = vpack.c.bf16 %v259, %v258
        %v263 = vpack.c.bf16 %v261, %v260
        %vm264 = vcmask 261120
        %v266 = vsel %vm264, %v255, 0
        %268 = vmatpush.bf16.msra.mxu0 0
        %269 = vmatpush.bf16.msra.mxu0 0
        %270 = vmatpush.bf16.msra.mxu0 0
        %271 = vmatpush.bf16.msra.mxu0 0
        %272 = vmatpush.bf16.msra.mxu0 0
        %273 = vmatpush.bf16.msra.mxu0 0
        %274 = vmatpush.bf16.msra.mxu0 %v263
        %275 = vmatpush.bf16.msra.mxu0 %v262
        %276 = vmatmul.bf16.gmra.mxu0 %v266
        %v277 = vpop.f32.mrf.mxu0
        %v278 = vadd.f32 0.0, %v277
        %v279 = vpop.f32.mrf.mxu0
        %280 = vdwg.mxu0
        %v281 = vpack.c.bf16 %v278, %v278
        %v284 = vunpack.c.l.b16 %v256
        %v285 = vunpack.c.l.b16 %v257
        %v286 = vpack.c.b16 %v285, %v284
        %v288 = vsel %vm264, %v281, 0
        %v291 = vsel %vm264, %v286, 0
        %293 = vmatpush.bf16.xpose.msra.mxu0 0
        %294 = vmatpush.bf16.xpose.msra.mxu0 0
        %295 = vmatpush.bf16.xpose.msra.mxu0 0
        %296 = vmatpush.bf16.xpose.msra.mxu0 0
        %297 = vmatpush.bf16.xpose.msra.mxu0 0
        %298 = vmatpush.bf16.xpose.msra.mxu0 0
        %299 = vmatpush.bf16.xpose.msra.mxu0 0
        %300 = vmatpush.bf16.xpose.msra.mxu0 %v291
        %301 = vmatmul.bf16.gmra.mxu0 %v288
        %v302 = vpop.f32.mrf.mxu0
        %v303 = vadd.f32 0.0, %v302
        %v304 = vpop.f32.mrf.mxu0
        %305 = vdwg.mxu0
        %vm306 = vcmask 130048
        %v307 = vsel %vm306, %v303, -inf
        %308 = vmax.xlane.f32.xlu0 %v307
        %v309 = vpop.xlane.xlu0 %308
        %v310 = vsub.f32 %v303, %v309
        %v311 = vmul.f32 %v310, 1.442695
        %v312 = vpow.pop %v311
        %v313 = vsel %vm306, %v312, 0.0
        %314 = vadd.xlane.f32.xlu0 %v313
        %v315 = vpop.xlane.xlu0 %314
        %v316 = vrcp.pop %v315
        %v317 = vmul.f32 %v312, %v316
        %v318 = vpack.c.bf16 %v317, %v317
        %v321 = vsel %vm306, %v318, 0
        %323 = vmatpush.bf16.msra.mxu0 0
        %324 = vmatpush.bf16.msra.mxu0 0
        %325 = vmatpush.bf16.msra.mxu0 0
        %326 = vmatpush.bf16.msra.mxu0 0
        %327 = vmatpush.bf16.msra.mxu0 0
        %328 = vmatpush.bf16.msra.mxu0 0
        %329 = vmatpush.bf16.msra.mxu0 0
        %330 = vmatpush.bf16.msra.mxu0 %v286
        %331 = vmatmul.bf16.gmra.mxu0 %v321
        %v332 = vpop.f32.mrf.mxu0
        %v333 = vadd.f32 0.0, %v332
        %v334 = vpop.f32.mrf.mxu0
        %335 = vdwg.mxu0
        %v336 = vld [vmem:[%s3] sm:$0xff]
        %v337 = vld [vmem:[%s3 + $0x8] sm:$0xff]
        %v338 = vld [vmem:[%s3 + $0x10] sm:$0xff]
        %v339 = vld [vmem:[%s3 + $0x18] sm:$0xff]
        %v340 = vpack.c.bf16 %v337, %v336
        %v341 = vpack.c.bf16 %v339, %v338
        %v342 = vld [vmem:[%s3 + $0x20] sm:$0xff]
        %v343 = vld [vmem:[%s3 + $0x28] sm:$0xff]
        %v344 = vld [vmem:[%s3 + $0x30] sm:$0xff]
        %v345 = vld [vmem:[%s3 + $0x38] sm:$0xff]
        %v346 = vpack.c.bf16 %v343, %v342
        %v347 = vpack.c.bf16 %v345, %v344
        %v348 = vpack.c.bf16 %v333, %v333
        %349 = vmatpush.bf16.msra.mxu0 0
        %350 = vmatpush.bf16.msra.mxu0 0
        %351 = vmatpush.bf16.msra.mxu0 0
        %352 = vmatpush.bf16.msra.mxu0 0
        %353 = vmatpush.bf16.msra.mxu0 0
        %354 = vmatpush.bf16.msra.mxu0 0
        %355 = vmatpush.bf16.msra.mxu0 %v347
        %356 = vmatpush.bf16.msra.mxu0 %v346
        %357 = vmatmul.bf16.gmra.mxu0 %v288
        %v358 = vpop.f32.mrf.mxu0
        %v359 = vadd.f32 0.0, %v358
        %v360 = vpop.f32.mrf.mxu0
        %361 = vdwg.mxu0
        %v363 = vsel %vm264, %v348, 0
        %365 = vmatpush.bf16.msra.mxu0 0
        %366 = vmatpush.bf16.msra.mxu0 0
        %367 = vmatpush.bf16.msra.mxu0 0
        %368 = vmatpush.bf16.msra.mxu0 0
        %369 = vmatpush.bf16.msra.mxu0 0
        %370 = vmatpush.bf16.msra.mxu0 0
        %371 = vmatpush.bf16.msra.mxu0 %v341
        %372 = vmatpush.bf16.msra.mxu0 %v340
        %373 = vmatmul.bf16.gmra.mxu0 %v363
        %v374 = vpop.f32.mrf.mxu0
        %v375 = vadd.f32 %v359, %v374
        %v376 = vpop.f32.mrf.mxu0
        %377 = vdwg.mxu0
        %v378 = vtanh.pop %v375
        %379 = vst.msk [vmem:[%s234] sm:$0xff] %vm264, %v378
        %380 = vst.msk [vmem:[%s241] sm:$0xff] %vm306, %v317
        %s381 = sand.u32 %s125, 1
        %s382 = scalar_lea.sflag [#allocation3], %s381
        %s383 = sand.u32 %s125, 1
        %s384 = smul.addr %s383, 8
        %s385 = scalar_lea.vmem [#allocation2], %s384
        %s386 = sand.u32 %s151, 1
        %s387 = scalar_lea.sflag [#allocation5], %s386
        %s388 = sand.u32 %s151, 1
        %s389 = smul.addr %s388, 8
        %s390 = scalar_lea.vmem [#allocation4], %s389
        // Predicated region
        $region37: #{tpu_custom_call.1} parent=35 // pred_check
          %p391 = pneg %p135
        $region38: #{tpu_custom_call.1} parent=35 // pred_check_branch
          %393 = sbr.rel (%p391) target = $region40
        $region39: #{tpu_custom_call.1} parent=35 // pred_region
          %395 = vsyncadd %s382, 0
          %s396 = smul.addr %s23, 8
          %s397 = scalar_lea.hbm %s4, %s396
          %s399 = sshll.u32 %s385, 4
          %s400 = int_to_ptr.vmem [resolvable:$true] %s399
          %s401 = sshll.u32 %s397, 4
          %s402 = int_to_ptr.hbm [resolvable:$true] %s401
          %404 = dma.vmem_to_hbm [thread:$0]  %s400, 128, %s402, %s382
        $region40: #{tpu_custom_call.1} parent=35 // pred_fallthru
          _
        // Predicated region
        $region41: #{tpu_custom_call.1} parent=35 // pred_check
          %p405 = pneg %p161
        $region42: #{tpu_custom_call.1} parent=35 // pred_check_branch
          %407 = sbr.rel (%p405) target = $region44
        $region43: #{tpu_custom_call.1} parent=35 // pred_region
          %409 = vsyncadd %s387, 0
          %s410 = smul.addr %s23, 8
          %s411 = scalar_lea.hbm %s5, %s410
          %s413 = sshll.u32 %s390, 4
          %s414 = int_to_ptr.vmem [resolvable:$true] %s413
          %s415 = sshll.u32 %s411, 4
          %s416 = int_to_ptr.hbm [resolvable:$true] %s415
          %418 = dma.vmem_to_hbm [thread:$0]  %s414, 128, %s416, %s387
        $region44: #{tpu_custom_call.1} parent=35 // pred_fallthru
          _
      $region36: #{tpu_custom_call.1} parent=5 // pred_fallthru
        _
      %p419 = scmp.le.s32.totalorder 2, %s18
      // Predicated region
      $region45: #{tpu_custom_call.1} parent=5 // pred_check
        %p420 = pneg %p419
      $region46: #{tpu_custom_call.1} parent=5 // pred_check_branch
        %422 = sbr.rel (%p420) target = $region48
      $region47: #{tpu_custom_call.1} parent=5 // pred_region
        %s423 = ssub.s32 %s18, 2
        // Predicated region
        $region49: #{tpu_custom_call.1} parent=47 // pred_check
          %p424 = pneg %p141
        $region50: #{tpu_custom_call.1} parent=47 // pred_check_branch
          %426 = sbr.rel (%p424) target = $region52
        $region51: #{tpu_custom_call.1} parent=47 // pred_region
          %s427 = sand.u32 %s126, 1
          %s428 = scalar_lea.sflag [#allocation3], %s427
          %s429 = sand.u32 %s126, 1
          %s430 = smul.addr %s429, 8
          %s431 = scalar_lea.vmem [#allocation2], %s430
          %433 = dma.done %s428, 128
        $region52: #{tpu_custom_call.1} parent=47 // pred_fallthru
          _
        // Predicated region
        $region53: #{tpu_custom_call.1} parent=47 // pred_check
          %p434 = pneg %p167
        $region54: #{tpu_custom_call.1} parent=47 // pred_check_branch
          %436 = sbr.rel (%p434) target = $region56
        $region55: #{tpu_custom_call.1} parent=47 // pred_region
          %s437 = sand.u32 %s152, 1
          %s438 = scalar_lea.sflag [#allocation5], %s437
          %s439 = sand.u32 %s152, 1
          %s440 = smul.addr %s439, 8
          %s441 = scalar_lea.vmem [#allocation4], %s440
          %443 = dma.done %s438, 128
        $region56: #{tpu_custom_call.1} parent=47 // pred_fallthru
          _
      $region48: #{tpu_custom_call.1} parent=5 // pred_fallthru
        _
    $region6: #{tpu_custom_call.1} parent=1 // loop_footer
      %s22 = sadd.s32 1, %s18
    $region7: #{tpu_custom_call.1} parent=1 // loop_footer_branch
      %17 = sbr.rel target = $region3
    $region8: #{tpu_custom_call.1} parent=1 // loop_exit
      _
    %444 = vsyncpa [#allocation3], 1
    %s445 = scalar_lea.sflag [#allocation3], 1
    %446 = vsyncpa %s445, 1
    %447 = vsyncpa [#allocation5], 1
    %s448 = scalar_lea.sflag [#allocation5], 1
    %449 = vsyncpa %s448, 1

</llo_original>
